<compile_context>
chip_gen: v6e
topology: v6e:2x2x1
jax: 0.10.0
libtpu: 0.0.40
codegen_flags: <defaults>
</compile_context>

<pallas_src>
import functools

import jax
import jax.numpy as jnp
from jax.experimental import pallas as pl
from jax.experimental.pallas import tpu as pltpu


# ----------------------------- helpers ---------------------------------------
def _round_up(n, m):
    return ((n + m - 1) // m) * m


def _pick_tile_b(b_pad):
    for t in (256, 128, 64, 32, 16, 8):
        if b_pad % t == 0:
            return min(t, b_pad)
    return b_pad


# ----------------------------- Pallas kernel ---------------------------------
def _fused_mlp_kernel(*refs, num_linear):
    """refs = (x, w1, b1, ..., wL, bL, out). One batch tile per grid step.

    Weights are bf16, biases f32. Layers 0..L-2 are Linear+ReLU, the last
    layer is Linear+Sigmoid. Activation math runs in f32 (the MXU accumulator
    dtype); activations are cast to bf16 only as the next matmul operand.
    Intermediates never leave VMEM/vregs.
    """
    x_ref = refs[0]
    o_ref = refs[-1]
    wb = refs[1:-1]

    h = x_ref[...].astype(jnp.float32)
    for i in range(num_linear):
        w = wb[2 * i][...]                      # (Din_pad, Dout_pad) bf16
        b = wb[2 * i + 1][...]                  # (1, Dout_pad) f32, bcast rows
        y = jnp.dot(h.astype(jnp.bfloat16), w,
                    preferred_element_type=jnp.float32) + b
        if i < num_linear - 1:
            h = jnp.maximum(y, 0.0)             # ReLU in f32
        else:
            h = jax.nn.sigmoid(y)               # final Sigmoid in f32 (EUP)
    o_ref[...] = h.astype(o_ref.dtype)


def fused_mlp(x_pad, flat_params):
    """x_pad: (B_pad, Din_pad) f32. flat_params: [w1,b1,...,wL,bL] (padded).

    Batch axis is tiled over a "parallel" grid dimension; weight/bias blocks
    use constant index_maps so they are loaded into VMEM once and reused
    across all batch tiles.
    """
    num_linear = len(flat_params) // 2
    b_pad, din_pad = x_pad.shape
    dout_pad = flat_params[-1].shape[-1]
    tile_b = _pick_tile_b(b_pad)

    in_specs = [pl.BlockSpec((tile_b, din_pad), lambda i: (i, 0))]
    for p in flat_params:
        in_specs.append(pl.BlockSpec(p.shape, lambda i: (0, 0)))
    out_specs = pl.BlockSpec((tile_b, dout_pad), lambda i: (i, 0))

    return pl.pallas_call(
        functools.partial(_fused_mlp_kernel, num_linear=num_linear),
        out_shape=jax.ShapeDtypeStruct((b_pad, dout_pad), jnp.float32),
        grid=(b_pad // tile_b,),
        in_specs=in_specs,
        out_specs=out_specs,
        compiler_params=pltpu.CompilerParams(
            dimension_semantics=("parallel",)),
    )(x_pad, *flat_params)


# ----------------------------- Parameter init --------------------------------
def _init_linear_padded(key, fan_in, fan_out, lane=128):
    """torch.nn.Linear-style init (uniform +-1/sqrt(fan_in)), stored transposed
    as (in, out). Weights are zero-padded to lane-aligned shapes and kept in
    bf16 (halves weight DMA); biases stay f32 as a (1, Dout_pad) row."""
    kw, kb = jax.random.split(key)
    bound = 1.0 / float(fan_in) ** 0.5
    w = jax.random.uniform(kw, (fan_in, fan_out), jnp.float32, -bound, bound)
    b = jax.random.uniform(kb, (fan_out,), jnp.float32, -bound, bound)
    in_p, out_p = _round_up(fan_in, lane), _round_up(fan_out, lane)
    w_pad = (jnp.zeros((in_p, out_p), jnp.bfloat16)
             .at[:fan_in, :fan_out].set(w.astype(jnp.bfloat16)))
    b_pad = jnp.zeros((1, out_p), jnp.float32).at[0, :fan_out].set(b)
    return (w_pad, b_pad), (w, b)


def make_net_params(key, input_channels, output_channels, hidden_units, khidden):
    """Builds padded bf16/f32 params (for the kernel) and unpadded f32 params
    (for the pure-JAX reference)."""
    num_layer = len(khidden)
    dims = [input_channels] + [k * hidden_units for k in khidden]
    dims = dims + [output_channels, output_channels]   # fcbfend, fcend
    keys = jax.random.split(key, len(dims) - 1)
    padded, real = [], []
    for i in range(len(dims) - 1):
        (w_p, b_p), (w, b) = _init_linear_padded(keys[i], dims[i], dims[i + 1])
        padded.extend([w_p, b_p])
        real.append((w, b))
    return padded, real, num_layer


# ----------------------------- Forward (Net.forward) -------------------------
def make_net_forward(flat_padded_params, input_channels, output_channels):
    din_pad = flat_padded_params[0].shape[0]

    @jax.jit
    def forward_padded(x_pad):
        """Hot path: a single pallas_call, no wrapper-side pad/slice ops."""
        return fused_mlp(x_pad, flat_padded_params)

    def pad_input(x, b_pad=None):
        """One-time setup: place x into a lane-dense (B_pad, Din_pad) buffer."""
        B = x.shape[0]
        if b_pad is None:
            b_pad = max(8, _round_up(B, 8))
        return (jnp.zeros((b_pad, din_pad), jnp.float32)
                .at[:B, :input_channels].set(x.astype(jnp.float32)))

    def forward(x):
        """Convenience one-shot path (pads, runs, slices)."""
        B = x.shape[0]
        out_pad = forward_padded(pad_input(x))
        return out_pad[:B, :output_channels]

    return forward, forward_padded, pad_input


# ----------------------------- Reference (pure JAX) --------------------------
def reference_forward_bf16(real_params, x):
    """Same math as the kernel: bf16 matmul operands, f32 accumulate/activations."""
    h = x.astype(jnp.float32)
    for i, (w, b) in enumerate(real_params):
        y = jnp.dot(h.astype(jnp.bfloat16), w.astype(jnp.bfloat16),
                    preferred_element_type=jnp.float32) + b
        h = jnp.maximum(y, 0.0) if i < len(real_params) - 1 else jax.nn.sigmoid(y)
    return h


# ----------------------------- Demo -------------------------------------------
if __name__ == "__main__":
    input_channels = 16
    output_channels = 8
    hidden_units = 32
    khidden = [2, 3]          # num_layer = 2 -> fc1: 16->64, fc2: 64->96
    batch = 4

    key = jax.random.PRNGKey(0)
    kp, kx = jax.random.split(key)
    padded_params, real_params, num_layer = make_net_params(
        kp, input_channels, output_channels, hidden_units, khidden
    )
    x = jax.random.normal(kx, (batch, input_channels), jnp.float32)

    forward, forward_padded, pad_input = make_net_forward(
        padded_params, input_channels, output_channels
    )

    # Pad once (setup), run the hot path, slice only where consumed.
    x_pad = pad_input(x)
    out_pad = jax.block_until_ready(forward_padded(x_pad))
    out = out_pad[:batch, :output_channels]

    assert out.shape == (batch, output_channels)
    assert bool(jnp.all((out > 0.0) & (out < 1.0)))

    ref = reference_forward_bf16(real_params, x)
    assert bool(jnp.allclose(out, ref, atol=2e-3, rtol=2e-3))

    print("KERNEL_OK")
</pallas_src>

<mosaic_0001>
module attributes {stable_mosaic.version = 11 : i64} {
  func.func @_fused_mlp_kernel(%arg0: i32, %arg1: memref<8x128xf32, #tpu.memory_space<vmem>>, %arg2: memref<128x128xbf16, #tpu.memory_space<vmem>>, %arg3: memref<1x128xf32, #tpu.memory_space<vmem>>, %arg4: memref<128x128xbf16, #tpu.memory_space<vmem>>, %arg5: memref<1x128xf32, #tpu.memory_space<vmem>>, %arg6: memref<128x128xbf16, #tpu.memory_space<vmem>>, %arg7: memref<1x128xf32, #tpu.memory_space<vmem>>, %arg8: memref<128x128xbf16, #tpu.memory_space<vmem>>, %arg9: memref<1x128xf32, #tpu.memory_space<vmem>>, %arg10: memref<8x128xf32, #tpu.memory_space<vmem>>) attributes {dimension_semantics = [#tpu.dimension_semantics<parallel>], iteration_bounds = array<i64: 1>, scalar_prefetch = 0 : i64, scratch_operands = 0 : i64, tpu.core_type = #tpu.core_type<tc>, window_params = [{transform_indices = @transform_0, window_bounds = array<i64: 8, 128>}, {pipeline_mode = #tpu.pipeline_mode<synchronous>, transform_indices = @transform_1, window_bounds = array<i64: 128, 128>}, {pipeline_mode = #tpu.pipeline_mode<synchronous>, transform_indices = @transform_2, window_bounds = array<i64: 1, 128>}, {pipeline_mode = #tpu.pipeline_mode<synchronous>, transform_indices = @transform_3, window_bounds = array<i64: 128, 128>}, {pipeline_mode = #tpu.pipeline_mode<synchronous>, transform_indices = @transform_4, window_bounds = array<i64: 1, 128>}, {pipeline_mode = #tpu.pipeline_mode<synchronous>, transform_indices = @transform_5, window_bounds = array<i64: 128, 128>}, {pipeline_mode = #tpu.pipeline_mode<synchronous>, transform_indices = @transform_6, window_bounds = array<i64: 1, 128>}, {pipeline_mode = #tpu.pipeline_mode<synchronous>, transform_indices = @transform_7, window_bounds = array<i64: 128, 128>}, {pipeline_mode = #tpu.pipeline_mode<synchronous>, transform_indices = @transform_8, window_bounds = array<i64: 1, 128>}, {transform_indices = @transform_9, window_bounds = array<i64: 8, 128>}]} {
    %c0 = arith.constant 0 : index
    %c0_0 = arith.constant 0 : index
    %0 = vector.load %arg1[%c0, %c0_0] : memref<8x128xf32, #tpu.memory_space<vmem>>, vector<8x128xf32>
    %c0_1 = arith.constant 0 : index
    %c0_2 = arith.constant 0 : index
    %1 = vector.load %arg2[%c0_1, %c0_2] : memref<128x128xbf16, #tpu.memory_space<vmem>>, vector<128x128xbf16>
    %c0_3 = arith.constant 0 : index
    %c0_4 = arith.constant 0 : index
    %2 = vector.load %arg3[%c0_3, %c0_4] : memref<1x128xf32, #tpu.memory_space<vmem>>, vector<1x128xf32>
    %3 = arith.truncf %0 : vector<8x128xf32> to vector<8x128xbf16>
    %cst = arith.constant dense<0.000000e+00> : vector<8x128xf32>
    %4 = tpu.matmul %3, %1, %cst {dimension_numbers = #tpu.dot_dimension_numbers<[1], [0], [0], [1], [0, 0, 1, 1], [], []>} : vector<8x128xbf16>, vector<128x128xbf16>, vector<8x128xf32> -> vector<8x128xf32>
    %5 = vector.broadcast %2 : vector<1x128xf32> to vector<8x128xf32>
    %6 = arith.addf %4, %5 : vector<8x128xf32>
    %cst_5 = arith.constant 0.000000e+00 : f32
    %7 = vector.broadcast %cst_5 : f32 to vector<8x128xf32>
    %8 = arith.maximumf %6, %7 : vector<8x128xf32>
    %c0_6 = arith.constant 0 : index
    %c0_7 = arith.constant 0 : index
    %9 = vector.load %arg4[%c0_6, %c0_7] : memref<128x128xbf16, #tpu.memory_space<vmem>>, vector<128x128xbf16>
    %c0_8 = arith.constant 0 : index
    %c0_9 = arith.constant 0 : index
    %10 = vector.load %arg5[%c0_8, %c0_9] : memref<1x128xf32, #tpu.memory_space<vmem>>, vector<1x128xf32>
    %11 = arith.truncf %8 : vector<8x128xf32> to vector<8x128xbf16>
    %cst_10 = arith.constant dense<0.000000e+00> : vector<8x128xf32>
    %12 = tpu.matmul %11, %9, %cst_10 {dimension_numbers = #tpu.dot_dimension_numbers<[1], [0], [0], [1], [0, 0, 1, 1], [], []>} : vector<8x128xbf16>, vector<128x128xbf16>, vector<8x128xf32> -> vector<8x128xf32>
    %13 = vector.broadcast %10 : vector<1x128xf32> to vector<8x128xf32>
    %14 = arith.addf %12, %13 : vector<8x128xf32>
    %cst_11 = arith.constant 0.000000e+00 : f32
    %15 = vector.broadcast %cst_11 : f32 to vector<8x128xf32>
    %16 = arith.maximumf %14, %15 : vector<8x128xf32>
    %c0_12 = arith.constant 0 : index
    %c0_13 = arith.constant 0 : index
    %17 = vector.load %arg6[%c0_12, %c0_13] : memref<128x128xbf16, #tpu.memory_space<vmem>>, vector<128x128xbf16>
    %c0_14 = arith.constant 0 : index
    %c0_15 = arith.constant 0 : index
    %18 = vector.load %arg7[%c0_14, %c0_15] : memref<1x128xf32, #tpu.memory_space<vmem>>, vector<1x128xf32>
    %19 = arith.truncf %16 : vector<8x128xf32> to vector<8x128xbf16>
    %cst_16 = arith.constant dense<0.000000e+00> : vector<8x128xf32>
    %20 = tpu.matmul %19, %17, %cst_16 {dimension_numbers = #tpu.dot_dimension_numbers<[1], [0], [0], [1], [0, 0, 1, 1], [], []>} : vector<8x128xbf16>, vector<128x128xbf16>, vector<8x128xf32> -> vector<8x128xf32>
    %21 = vector.broadcast %18 : vector<1x128xf32> to vector<8x128xf32>
    %22 = arith.addf %20, %21 : vector<8x128xf32>
    %cst_17 = arith.constant 0.000000e+00 : f32
    %23 = vector.broadcast %cst_17 : f32 to vector<8x128xf32>
    %24 = arith.maximumf %22, %23 : vector<8x128xf32>
    %c0_18 = arith.constant 0 : index
    %c0_19 = arith.constant 0 : index
    %25 = vector.load %arg8[%c0_18, %c0_19] : memref<128x128xbf16, #tpu.memory_space<vmem>>, vector<128x128xbf16>
    %c0_20 = arith.constant 0 : index
    %c0_21 = arith.constant 0 : index
    %26 = vector.load %arg9[%c0_20, %c0_21] : memref<1x128xf32, #tpu.memory_space<vmem>>, vector<1x128xf32>
    %27 = arith.truncf %24 : vector<8x128xf32> to vector<8x128xbf16>
    %cst_22 = arith.constant dense<0.000000e+00> : vector<8x128xf32>
    %28 = tpu.matmul %27, %25, %cst_22 {dimension_numbers = #tpu.dot_dimension_numbers<[1], [0], [0], [1], [0, 0, 1, 1], [], []>} : vector<8x128xbf16>, vector<128x128xbf16>, vector<8x128xf32> -> vector<8x128xf32>
    %29 = vector.broadcast %26 : vector<1x128xf32> to vector<8x128xf32>
    %30 = arith.addf %28, %29 : vector<8x128xf32>
    %31 = arith.negf %30 : vector<8x128xf32>
    %32 = math.exp %31 : vector<8x128xf32>
    %cst_23 = arith.constant 1.000000e+00 : f32
    %33 = vector.broadcast %cst_23 : f32 to vector<8x128xf32>
    %34 = arith.addf %33, %32 : vector<8x128xf32>
    %35 = arith.divf %33, %34 : vector<8x128xf32>
    %c0_24 = arith.constant 0 : index
    %c0_25 = arith.constant 0 : index
    %36 = vector.load %arg10[%c0_24, %c0_25] : memref<8x128xf32, #tpu.memory_space<vmem>>, vector<8x128xf32>
    tpu.vector_store %arg10[%c0_24, %c0_25], %35 {strides = array<i32>} : memref<8x128xf32, #tpu.memory_space<vmem>>, vector<8x128xf32>,
    return
  }
  func.func @transform_0(%arg0: i32) -> (i32, i32) {
    %c0_i32 = arith.constant 0 : i32
    %c0_i32_0 = arith.constant 0 : i32
    return %arg0, %c0_i32 : i32, i32
  }
  func.func @transform_1(%arg0: i32) -> (i32, i32) {
    %c0_i32 = arith.constant 0 : i32
    %c0_i32_0 = arith.constant 0 : i32
    %c0_i32_1 = arith.constant 0 : i32
    return %c0_i32, %c0_i32_0 : i32, i32
  }
  func.func @transform_2(%arg0: i32) -> (i32, i32) {
    %c0_i32 = arith.constant 0 : i32
    %c0_i32_0 = arith.constant 0 : i32
    %c0_i32_1 = arith.constant 0 : i32
    return %c0_i32, %c0_i32_0 : i32, i32
  }
  func.func @transform_3(%arg0: i32) -> (i32, i32) {
    %c0_i32 = arith.constant 0 : i32
    %c0_i32_0 = arith.constant 0 : i32
    %c0_i32_1 = arith.constant 0 : i32
    return %c0_i32, %c0_i32_0 : i32, i32
  }
  func.func @transform_4(%arg0: i32) -> (i32, i32) {
    %c0_i32 = arith.constant 0 : i32
    %c0_i32_0 = arith.constant 0 : i32
    %c0_i32_1 = arith.constant 0 : i32
    return %c0_i32, %c0_i32_0 : i32, i32
  }
  func.func @transform_5(%arg0: i32) -> (i32, i32) {
    %c0_i32 = arith.constant 0 : i32
    %c0_i32_0 = arith.constant 0 : i32
    %c0_i32_1 = arith.constant 0 : i32
    return %c0_i32, %c0_i32_0 : i32, i32
  }
  func.func @transform_6(%arg0: i32) -> (i32, i32) {
    %c0_i32 = arith.constant 0 : i32
    %c0_i32_0 = arith.constant 0 : i32
    %c0_i32_1 = arith.constant 0 : i32
    return %c0_i32, %c0_i32_0 : i32, i32
  }
  func.func @transform_7(%arg0: i32) -> (i32, i32) {
    %c0_i32 = arith.constant 0 : i32
    %c0_i32_0 = arith.constant 0 : i32
    %c0_i32_1 = arith.constant 0 : i32
    return %c0_i32, %c0_i32_0 : i32, i32
  }
  func.func @transform_8(%arg0: i32) -> (i32, i32) {
    %c0_i32 = arith.constant 0 : i32
    %c0_i32_0 = arith.constant 0 : i32
    %c0_i32_1 = arith.constant 0 : i32
    return %c0_i32, %c0_i32_0 : i32, i32
  }
  func.func @transform_9(%arg0: i32) -> (i32, i32) {
    %c0_i32 = arith.constant 0 : i32
    %c0_i32_0 = arith.constant 0 : i32
    return %arg0, %c0_i32 : i32, i32
  }
}

</mosaic_0001>

<llo_original>
// kernel: forward_padded.1
$region0: #{forward_padded.1}
  #allocation0 [shape = 'u32[]', space=smem, size = 0x4, offset = 0x4, fixed_abs, tag = 'smem constant byte address 0x4 - core index']
  #allocation1 [shape = 'u32[144,128]{1,0:T(1,128)}', space=vmem, size = 0x12000, scoped, tag = 'internal scratch']
  %s0 = inlined_call_operand.hbm [shape: f32[8,128], index: 0, kind: input, shape index: {}]
  %s1 = inlined_call_operand.hbm [shape: bf16[128,128], index: 1, kind: input, shape index: {}]
  %s2 = inlined_call_operand.hbm [shape: f32[1,128], index: 2, kind: input, shape index: {}]
  %s3 = inlined_call_operand.hbm [shape: bf16[128,128], index: 3, kind: input, shape index: {}]
  %s4 = inlined_call_operand.vmem [shape: f32[1,128], index: 4, kind: input, shape index: {}]
  %s5 = inlined_call_operand.hbm [shape: bf16[128,128], index: 5, kind: input, shape index: {}]
  %s6 = inlined_call_operand.vmem [shape: f32[1,128], index: 6, kind: input, shape index: {}]
  %s7 = inlined_call_operand.hbm [shape: bf16[128,128], index: 7, kind: input, shape index: {}]
  %s8 = inlined_call_operand.vmem [shape: f32[1,128], index: 8, kind: input, shape index: {}]
  %s9 = inlined_call_operand.hbm [shape: f32[8,128], index: 9, kind: output, shape index: {}]
  %s10 = sld [smem:[#allocation0]]
  $region70: #{forward_padded.1} parent=0
    _
  %s12 = ssub.s32 1, %s10
  %s13 = scalar_select 0, %s12, %s10
  $region1: #{forward_padded.1} parent=0
    #allocation2 [shape = 'u8[4096]{0}', space=vmem, size = 0x1000, scoped, tag = 'input window, operand 0, single buffered']
    #allocation3 [shape = 's32[1]{0}', space=sflag, size = 0x4, scoped, tag = 'scoped memory for forward_padded.1']
    #allocation4 [shape = 's32[1]{0}', space=sflag, size = 0x4, scoped, tag = 'scoped memory for forward_padded.1']
    #allocation5 [shape = 'u8[32768]{0}', space=vmem, size = 0x8000, scoped, tag = 'input window, operand 1, single buffered']
    #allocation6 [shape = 's32[1]{0}', space=sflag, size = 0x4, scoped, tag = 'scoped memory for forward_padded.1']
    #allocation7 [shape = 'u8[512]{0}', space=vmem, size = 0x400, scoped, tag = 'input window, operand 2, single buffered']
    #allocation8 [shape = 'u8[32768]{0}', space=vmem, size = 0x8000, scoped, tag = 'input window, operand 3, single buffered']
    #allocation9 [shape = 's32[1]{0}', space=sflag, size = 0x4, scoped, tag = 'scoped memory for forward_padded.1']
    #allocation10 [shape = 'u8[32768]{0}', space=vmem, size = 0x8000, scoped, tag = 'input window, operand 5, single buffered']
    #allocation11 [shape = 'u8[32768]{0}', space=vmem, size = 0x8000, scoped, tag = 'input window, operand 7, single buffered']
    #allocation12 [shape = 's32[1]{0}', space=sflag, size = 0x4, scoped, tag = 'scoped memory for forward_padded.1']
    #allocation13 [shape = 'u8[4096]{0}', space=vmem, size = 0x1000, scoped, tag = 'output window, operand 0, single buffered']
    %14 = vsyncpa [#allocation3], 0
    %15 = vsyncpa [#allocation6], 0
    %16 = vsyncpa [#allocation9], 0
    %17 = vsyncpa [#allocation12], 0
    %18 = vsyncpa [#allocation4], 0
    // Predicated region
    $region2: #{forward_padded.1} parent=1 // pred_check
      _
    $region3: #{forward_padded.1} parent=1 // pred_check_branch
      %20 = sbr.rel (0) target = $region5
    $region4: #{forward_padded.1} parent=1 // pred_region
      %s22 = ssub.s32 128, 128
      %23 = vsyncadd [#allocation3], %s22
      %s25 = sshll.u32 [#allocation2], 4
      %s26 = int_to_ptr.vmem [resolvable:$true] %s25
      %28 = dma.hbm_to_vmem [thread:$0]  %s0, 128, %s26, [#allocation3]
    $region5: #{forward_padded.1} parent=1 // pred_fallthru
      _
    // Predicated region
    $region6: #{forward_padded.1} parent=1 // pred_check
      _
    $region7: #{forward_padded.1} parent=1 // pred_check_branch
      %30 = sbr.rel (0) target = $region9
    $region8: #{forward_padded.1} parent=1 // pred_region
      %s32 = ssub.s32 1024, 1024
      %33 = vsyncadd [#allocation6], %s32
      %s34 = sshll.u32 [#allocation5], 4
      %s35 = int_to_ptr.vmem [resolvable:$true] %s34
      %40 = dma.hbm_to_vmem [thread:$0]  %s1, 1024, %s35, [#allocation6], 64, 64, 4
    $region9: #{forward_padded.1} parent=1 // pred_fallthru
      _
    // Predicated region
    $region10: #{forward_padded.1} parent=1 // pred_check
      _
    $region11: #{forward_padded.1} parent=1 // pred_check_branch
      %42 = sbr.rel (0) target = $region13
    $region12: #{forward_padded.1} parent=1 // pred_region
      %s44 = ssub.s32 16, 16
      %45 = vsyncadd [#allocation6], %s44
      %s47 = sshll.u32 [#allocation7], 4
      %s48 = int_to_ptr.vmem [resolvable:$true] %s47
      %50 = dma.hbm_to_vmem [thread:$0]  %s2, 16, %s48, [#allocation6]
    $region13: #{forward_padded.1} parent=1 // pred_fallthru
      _
    // Predicated region
    $region14: #{forward_padded.1} parent=1 // pred_check
      _
    $region15: #{forward_padded.1} parent=1 // pred_check_branch
      %52 = sbr.rel (0) target = $region17
    $region16: #{forward_padded.1} parent=1 // pred_region
      %s54 = ssub.s32 1024, 1024
      %55 = vsyncadd [#allocation9], %s54
      %s56 = sshll.u32 [#allocation8], 4
      %s57 = int_to_ptr.vmem [resolvable:$true] %s56
      %62 = dma.hbm_to_vmem [thread:$0]  %s3, 1024, %s57, [#allocation9], 64, 64, 4
    $region17: #{forward_padded.1} parent=1 // pred_fallthru
      _
    // Predicated region
    $region18: #{forward_padded.1} parent=1 // pred_check
      _
    $region19: #{forward_padded.1} parent=1 // pred_check_branch
      %64 = sbr.rel (0) target = $region21
    $region20: #{forward_padded.1} parent=1 // pred_region
      _
    $region21: #{forward_padded.1} parent=1 // pred_fallthru
      _
    // Predicated region
    $region22: #{forward_padded.1} parent=1 // pred_check
      _
    $region23: #{forward_padded.1} parent=1 // pred_check_branch
      %66 = sbr.rel (0) target = $region25
    $region24: #{forward_padded.1} parent=1 // pred_region
      %s68 = ssub.s32 1024, 1024
      %69 = vsyncadd [#allocation9], %s68
      %s70 = sshll.u32 [#allocation10], 4
      %s71 = int_to_ptr.vmem [resolvable:$true] %s70
      %76 = dma.hbm_to_vmem [thread:$0]  %s5, 1024, %s71, [#allocation9], 64, 64, 4
    $region25: #{forward_padded.1} parent=1 // pred_fallthru
      _
    // Predicated region
    $region26: #{forward_padded.1} parent=1 // pred_check
      _
    $region27: #{forward_padded.1} parent=1 // pred_check_branch
      %78 = sbr.rel (0) target = $region29
    $region28: #{forward_padded.1} parent=1 // pred_region
      _
    $region29: #{forward_padded.1} parent=1 // pred_fallthru
      _
    // Predicated region
    $region30: #{forward_padded.1} parent=1 // pred_check
      _
    $region31: #{forward_padded.1} parent=1 // pred_check_branch
      %80 = sbr.rel (0) target = $region33
    $region32: #{forward_padded.1} parent=1 // pred_region
      %s82 = ssub.s32 1024, 1024
      %83 = vsyncadd [#allocation12], %s82
      %s84 = sshll.u32 [#allocation11], 4
      %s85 = int_to_ptr.vmem [resolvable:$true] %s84
      %90 = dma.hbm_to_vmem [thread:$0]  %s7, 1024, %s85, [#allocation12], 64, 64, 4
    $region33: #{forward_padded.1} parent=1 // pred_fallthru
      _
    // Predicated region
    $region34: #{forward_padded.1} parent=1 // pred_check
      _
    $region35: #{forward_padded.1} parent=1 // pred_check_branch
      %92 = sbr.rel (0) target = $region37
    $region36: #{forward_padded.1} parent=1 // pred_region
      _
    $region37: #{forward_padded.1} parent=1 // pred_fallthru
      _
    // Predicated region
    $region38: #{forward_padded.1} parent=1 // pred_check
      _
    $region39: #{forward_padded.1} parent=1 // pred_check_branch
      %94 = sbr.rel (0) target = $region41
    $region40: #{forward_padded.1} parent=1 // pred_region
      %95 = dma.done [#allocation3], 128
    $region41: #{forward_padded.1} parent=1 // pred_fallthru
      _
    // Predicated region
    $region42: #{forward_padded.1} parent=1 // pred_check
      _
    $region43: #{forward_padded.1} parent=1 // pred_check_branch
      %97 = sbr.rel (0) target = $region45
    $region44: #{forward_padded.1} parent=1 // pred_region
      %98 = dma.done [#allocation6], 1024
    $region45: #{forward_padded.1} parent=1 // pred_fallthru
      _
    // Predicated region
    $region46: #{forward_padded.1} parent=1 // pred_check
      _
    $region47: #{forward_padded.1} parent=1 // pred_check_branch
      %100 = sbr.rel (0) target = $region49
    $region48: #{forward_padded.1} parent=1 // pred_region
      %101 = dma.done [#allocation6], 16
    $region49: #{forward_padded.1} parent=1 // pred_fallthru
      _
    // Predicated region
    $region50: #{forward_padded.1} parent=1 // pred_check
      _
    $region51: #{forward_padded.1} parent=1 // pred_check_branch
      %103 = sbr.rel (0) target = $region53
    $region52: #{forward_padded.1} parent=1 // pred_region
      %104 = dma.done [#allocation9], 1024
    $region53: #{forward_padded.1} parent=1 // pred_fallthru
      _
    // Predicated region
    $region54: #{forward_padded.1} parent=1 // pred_check
      _
    $region55: #{forward_padded.1} parent=1 // pred_check_branch
      %106 = sbr.rel (0) target = $region57
    $region56: #{forward_padded.1} parent=1 // pred_region
      %107 = dma.done [#allocation9], 1024
    $region57: #{forward_padded.1} parent=1 // pred_fallthru
      _
    // Predicated region
    $region58: #{forward_padded.1} parent=1 // pred_check
      _
    $region59: #{forward_padded.1} parent=1 // pred_check_branch
      %109 = sbr.rel (0) target = $region61
    $region60: #{forward_padded.1} parent=1 // pred_region
      %110 = dma.done [#allocation12], 1024
    $region61: #{forward_padded.1} parent=1 // pred_fallthru
      _
    %v112 = vld [vmem:[#allocation2] sm:$0xff]
    %v113 = vld [vmem:[#allocation5] sm:$0xf]
    %v114 = vld [vmem:[#allocation5 + $0x4] sm:$0xf]
    %v115 = vld [vmem:[#allocation5 + $0x8] sm:$0xf]
    %v116 = vld [vmem:[#allocation5 + $0xc] sm:$0xf]
    %v117 = vld [vmem:[#allocation5 + $0x10] sm:$0xf]
    %v118 = vld [vmem:[#allocation5 + $0x14] sm:$0xf]
    %v119 = vld [vmem:[#allocation5 + $0x18] sm:$0xf]
    %v120 = vld [vmem:[#allocation5 + $0x1c] sm:$0xf]
    %v121 = vld [vmem:[#allocation5 + $0x20] sm:$0xf]
    %v122 = vld [vmem:[#allocation5 + $0x24] sm:$0xf]
    %v123 = vld [vmem:[#allocation5 + $0x28] sm:$0xf]
    %v124 = vld [vmem:[#allocation5 + $0x2c] sm:$0xf]
    %v125 = vld [vmem:[#allocation5 + $0x30] sm:$0xf]
    %v126 = vld [vmem:[#allocation5 + $0x34] sm:$0xf]
    %v127 = vld [vmem:[#allocation5 + $0x38] sm:$0xf]
    %v128 = vld [vmem:[#allocation5 + $0x3c] sm:$0xf]
    %v129 = vld [vmem:[#allocation7] sm:$0x1]
    %v130 = vpack.c.bf16 %v112, %v112
    %v132 = vlaneseq
    %v133 = vshrl.u32 %v132, 7
    %v134 = vsub.s32 0, %v133
    %v135 = vrot.slane %v129, %v134
    %v153 = vunpack.c.l.b16 %v113
    %v154 = vunpack.c.l.b16 %v114
    %v155 = vunpack.c.l.b16 %v115
    %v156 = vunpack.c.l.b16 %v116
    %v157 = vunpack.c.l.b16 %v117
    %v158 = vunpack.c.l.b16 %v118
    %v159 = vunpack.c.l.b16 %v119
    %v160 = vunpack.c.l.b16 %v120
    %v161 = vunpack.c.l.b16 %v121
    %v162 = vunpack.c.l.b16 %v122
    %v163 = vunpack.c.l.b16 %v123
    %v164 = vunpack.c.l.b16 %v124
    %v165 = vunpack.c.l.b16 %v125
    %v166 = vunpack.c.l.b16 %v126
    %v167 = vunpack.c.l.b16 %v127
    %v168 = vunpack.c.l.b16 %v128
    %v169 = vpack.c.b16 %v154, %v153
    %v170 = vpack.c.b16 %v156, %v155
    %v171 = vpack.c.b16 %v158, %v157
    %v172 = vpack.c.b16 %v160, %v159
    %v173 = vpack.c.b16 %v162, %v161
    %v174 = vpack.c.b16 %v164, %v163
    %v175 = vpack.c.b16 %v166, %v165
    %v176 = vpack.c.b16 %v168, %v167
    %185 = vmatprep.subr.bf16.mxu0 0
    %186 = vmatpush1.bf16.msra.mxu0 %v176
    %187 = vmatprep.subr.bf16.mxu0 0
    %188 = vmatpush1.bf16.msra.mxu0 %v175
    %189 = vmatprep.subr.bf16.mxu0 0
    %190 = vmatpush1.bf16.msra.mxu0 %v174
    %191 = vmatprep.subr.bf16.mxu0 0
    %192 = vmatpush1.bf16.msra.mxu0 %v173
    %193 = vmatprep.subr.bf16.mxu0 0
    %194 = vmatpush1.bf16.msra.mxu0 %v172
    %195 = vmatprep.subr.bf16.mxu0 0
    %196 = vmatpush1.bf16.msra.mxu0 %v171
    %197 = vmatprep.subr.bf16.mxu0 0
    %198 = vmatpush1.bf16.msra.mxu0 %v170
    %199 = vmatprep.subr.bf16.mxu0 0
    %200 = vmatpush1.bf16.msra.mxu0 %v169
    %201 = vmatprep.subr.bf16.mxu0 0
    %202 = vmatpush2.bf16.msra.mxu0 0
    %203 = vmatprep.subr.bf16.mxu0 0
    %204 = vmatpush2.bf16.msra.mxu0 0
    %205 = vmatprep.subr.bf16.mxu0 0
    %206 = vmatpush2.bf16.msra.mxu0 0
    %207 = vmatprep.subr.bf16.mxu0 0
    %208 = vmatpush2.bf16.msra.mxu0 0
    %209 = vmatprep.subr.bf16.mxu0 0
    %210 = vmatpush2.bf16.msra.mxu0 0
    %211 = vmatprep.subr.bf16.mxu0 0
    %212 = vmatpush2.bf16.msra.mxu0 0
    %213 = vmatprep.subr.bf16.mxu0 0
    %214 = vmatpush2.bf16.msra.mxu0 0
    %215 = vmatprep.subr.bf16.mxu0 0
    %216 = vmatpush2.bf16.msra.mxu0 0
    %217 = vmatprep.mubr.bf16.mxu0 0
    %218 = vmatmul.mubr.bf16.gmra.mxu0 %v130
    %v219 = vpop.f32.mrf.mxu0
    %v220 = vadd.f32 %v135, %v219
    %v221 = vpop.f32.mrf.mxu0
    %v222 = vpop.f32.mrf.mxu0
    %v223 = vpop.f32.mrf.mxu0
    %224 = vdwg.mxu0
    %v225 = vmax.f32 %v220, 0.0
    %v226 = vld [vmem:[#allocation8] sm:$0xf]
    %v227 = vld [vmem:[#allocation8 + $0x4] sm:$0xf]
    %v228 = vld [vmem:[#allocation8 + $0x8] sm:$0xf]
    %v229 = vld [vmem:[#allocation8 + $0xc] sm:$0xf]
    %v230 = vld [vmem:[#allocation8 + $0x10] sm:$0xf]
    %v231 = vld [vmem:[#allocation8 + $0x14] sm:$0xf]
    %v232 = vld [vmem:[#allocation8 + $0x18] sm:$0xf]
    %v233 = vld [vmem:[#allocation8 + $0x1c] sm:$0xf]
    %v234 = vld [vmem:[#allocation8 + $0x20] sm:$0xf]
    %v235 = vld [vmem:[#allocation8 + $0x24] sm:$0xf]
    %v236 = vld [vmem:[#allocation8 + $0x28] sm:$0xf]
    %v237 = vld [vmem:[#allocation8 + $0x2c] sm:$0xf]
    %v238 = vld [vmem:[#allocation8 + $0x30] sm:$0xf]
    %v239 = vld [vmem:[#allocation8 + $0x34] sm:$0xf]
    %v240 = vld [vmem:[#allocation8 + $0x38] sm:$0xf]
    %v241 = vld [vmem:[#allocation8 + $0x3c] sm:$0xf]
    %v242 = vld [vmem:[%s4] sm:$0x1]
    %v243 = vpack.c.bf16 %v225, %v225
    %v245 = vlaneseq
    %v246 = vshrl.u32 %v245, 7
    %v247 = vsub.s32 0, %v246
    %v248 = vrot.slane %v242, %v247
    %v266 = vunpack.c.l.b16 %v226
    %v267 = vunpack.c.l.b16 %v227
    %v268 = vunpack.c.l.b16 %v228
    %v269 = vunpack.c.l.b16 %v229
    %v270 = vunpack.c.l.b16 %v230
    %v271 = vunpack.c.l.b16 %v231
    %v272 = vunpack.c.l.b16 %v232
    %v273 = vunpack.c.l.b16 %v233
    %v274 = vunpack.c.l.b16 %v234
    %v275 = vunpack.c.l.b16 %v235
    %v276 = vunpack.c.l.b16 %v236
    %v277 = vunpack.c.l.b16 %v237
    %v278 = vunpack.c.l.b16 %v238
    %v279 = vunpack.c.l.b16 %v239
    %v280 = vunpack.c.l.b16 %v240
    %v281 = vunpack.c.l.b16 %v241
    %v282 = vpack.c.b16 %v267, %v266
    %v283 = vpack.c.b16 %v269, %v268
    %v284 = vpack.c.b16 %v271, %v270
    %v285 = vpack.c.b16 %v273, %v272
    %v286 = vpack.c.b16 %v275, %v274
    %v287 = vpack.c.b16 %v277, %v276
    %v288 = vpack.c.b16 %v279, %v278
    %v289 = vpack.c.b16 %v281, %v280
    %298 = vmatprep.subr.bf16.mxu0 0
    %299 = vmatpush1.bf16.msra.mxu0 %v289
    %300 = vmatprep.subr.bf16.mxu0 0
    %301 = vmatpush1.bf16.msra.mxu0 %v288
    %302 = vmatprep.subr.bf16.mxu0 0
    %303 = vmatpush1.bf16.msra.mxu0 %v287
    %304 = vmatprep.subr.bf16.mxu0 0
    %305 = vmatpush1.bf16.msra.mxu0 %v286
    %306 = vmatprep.subr.bf16.mxu0 0
    %307 = vmatpush1.bf16.msra.mxu0 %v285
    %308 = vmatprep.subr.bf16.mxu0 0
    %309 = vmatpush1.bf16.msra.mxu0 %v284
    %310 = vmatprep.subr.bf16.mxu0 0
    %311 = vmatpush1.bf16.msra.mxu0 %v283
    %312 = vmatprep.subr.bf16.mxu0 0
    %313 = vmatpush1.bf16.msra.mxu0 %v282
    %314 = vmatprep.subr.bf16.mxu0 0
    %315 = vmatpush2.bf16.msra.mxu0 0
    %316 = vmatprep.subr.bf16.mxu0 0
    %317 = vmatpush2.bf16.msra.mxu0 0
    %318 = vmatprep.subr.bf16.mxu0 0
    %319 = vmatpush2.bf16.msra.mxu0 0
    %320 = vmatprep.subr.bf16.mxu0 0
    %321 = vmatpush2.bf16.msra.mxu0 0
    %322 = vmatprep.subr.bf16.mxu0 0
    %323 = vmatpush2.bf16.msra.mxu0 0
    %324 = vmatprep.subr.bf16.mxu0 0
    %325 = vmatpush2.bf16.msra.mxu0 0
    %326 = vmatprep.subr.bf16.mxu0 0
    %327 = vmatpush2.bf16.msra.mxu0 0
    %328 = vmatprep.subr.bf16.mxu0 0
    %329 = vmatpush2.bf16.msra.mxu0 0
    %330 = vmatprep.mubr.bf16.mxu0 0
    %331 = vmatmul.mubr.bf16.gmra.mxu0 %v243
    %v332 = vpop.f32.mrf.mxu0
    %v333 = vadd.f32 %v248, %v332
    %v334 = vpop.f32.mrf.mxu0
    %v335 = vpop.f32.mrf.mxu0
    %v336 = vpop.f32.mrf.mxu0
    %337 = vdwg.mxu0
    %v338 = vmax.f32 %v333, 0.0
    %v339 = vld [vmem:[#allocation10] sm:$0xf]
    %v340 = vld [vmem:[#allocation10 + $0x4] sm:$0xf]
    %v341 = vld [vmem:[#allocation10 + $0x8] sm:$0xf]
    %v342 = vld [vmem:[#allocation10 + $0xc] sm:$0xf]
    %v343 = vld [vmem:[#allocation10 + $0x10] sm:$0xf]
    %v344 = vld [vmem:[#allocation10 + $0x14] sm:$0xf]
    %v345 = vld [vmem:[#allocation10 + $0x18] sm:$0xf]
    %v346 = vld [vmem:[#allocation10 + $0x1c] sm:$0xf]
    %v347 = vld [vmem:[#allocation10 + $0x20] sm:$0xf]
    %v348 = vld [vmem:[#allocation10 + $0x24] sm:$0xf]
    %v349 = vld [vmem:[#allocation10 + $0x28] sm:$0xf]
    %v350 = vld [vmem:[#allocation10 + $0x2c] sm:$0xf]
    %v351 = vld [vmem:[#allocation10 + $0x30] sm:$0xf]
    %v352 = vld [vmem:[#allocation10 + $0x34] sm:$0xf]
    %v353 = vld [vmem:[#allocation10 + $0x38] sm:$0xf]
    %v354 = vld [vmem:[#allocation10 + $0x3c] sm:$0xf]
    %v355 = vld [vmem:[%s6] sm:$0x1]
    %v356 = vpack.c.bf16 %v338, %v338
    %v358 = vlaneseq
    %v359 = vshrl.u32 %v358, 7
    %v360 = vsub.s32 0, %v359
    %v361 = vrot.slane %v355, %v360
    %v379 = vunpack.c.l.b16 %v339
    %v380 = vunpack.c.l.b16 %v340
    %v381 = vunpack.c.l.b16 %v341
    %v382 = vunpack.c.l.b16 %v342
    %v383 = vunpack.c.l.b16 %v343
    %v384 = vunpack.c.l.b16 %v344
    %v385 = vunpack.c.l.b16 %v345
    %v386 = vunpack.c.l.b16 %v346
    %v387 = vunpack.c.l.b16 %v347
    %v388 = vunpack.c.l.b16 %v348
    %v389 = vunpack.c.l.b16 %v349
    %v390 = vunpack.c.l.b16 %v350
    %v391 = vunpack.c.l.b16 %v351
    %v392 = vunpack.c.l.b16 %v352
    %v393 = vunpack.c.l.b16 %v353
    %v394 = vunpack.c.l.b16 %v354
    %v395 = vpack.c.b16 %v380, %v379
    %v396 = vpack.c.b16 %v382, %v381
    %v397 = vpack.c.b16 %v384, %v383
    %v398 = vpack.c.b16 %v386, %v385
    %v399 = vpack.c.b16 %v388, %v387
    %v400 = vpack.c.b16 %v390, %v389
    %v401 = vpack.c.b16 %v392, %v391
    %v402 = vpack.c.b16 %v394, %v393
    %411 = vmatprep.subr.bf16.mxu0 0
    %412 = vmatpush1.bf16.msra.mxu0 %v402
    %413 = vmatprep.subr.bf16.mxu0 0
    %414 = vmatpush1.bf16.msra.mxu0 %v401
    %415 = vmatprep.subr.bf16.mxu0 0
    %416 = vmatpush1.bf16.msra.mxu0 %v400
    %417 = vmatprep.subr.bf16.mxu0 0
    %418 = vmatpush1.bf16.msra.mxu0 %v399
    %419 = vmatprep.subr.bf16.mxu0 0
    %420 = vmatpush1.bf16.msra.mxu0 %v398
    %421 = vmatprep.subr.bf16.mxu0 0
    %422 = vmatpush1.bf16.msra.mxu0 %v397
    %423 = vmatprep.subr.bf16.mxu0 0
    %424 = vmatpush1.bf16.msra.mxu0 %v396
    %425 = vmatprep.subr.bf16.mxu0 0
    %426 = vmatpush1.bf16.msra.mxu0 %v395
    %427 = vmatprep.subr.bf16.mxu0 0
    %428 = vmatpush2.bf16.msra.mxu0 0
    %429 = vmatprep.subr.bf16.mxu0 0
    %430 = vmatpush2.bf16.msra.mxu0 0
    %431 = vmatprep.subr.bf16.mxu0 0
    %432 = vmatpush2.bf16.msra.mxu0 0
    %433 = vmatprep.subr.bf16.mxu0 0
    %434 = vmatpush2.bf16.msra.mxu0 0
    %435 = vmatprep.subr.bf16.mxu0 0
    %436 = vmatpush2.bf16.msra.mxu0 0
    %437 = vmatprep.subr.bf16.mxu0 0
    %438 = vmatpush2.bf16.msra.mxu0 0
    %439 = vmatprep.subr.bf16.mxu0 0
    %440 = vmatpush2.bf16.msra.mxu0 0
    %441 = vmatprep.subr.bf16.mxu0 0
    %442 = vmatpush2.bf16.msra.mxu0 0
    %443 = vmatprep.mubr.bf16.mxu0 0
    %444 = vmatmul.mubr.bf16.gmra.mxu0 %v356
    %v445 = vpop.f32.mrf.mxu0
    %v446 = vadd.f32 %v361, %v445
    %v447 = vpop.f32.mrf.mxu0
    %v448 = vpop.f32.mrf.mxu0
    %v449 = vpop.f32.mrf.mxu0
    %450 = vdwg.mxu0
    %v451 = vmax.f32 %v446, 0.0
    %v452 = vld [vmem:[#allocation11] sm:$0xf]
    %v453 = vld [vmem:[#allocation11 + $0x4] sm:$0xf]
    %v454 = vld [vmem:[#allocation11 + $0x8] sm:$0xf]
    %v455 = vld [vmem:[#allocation11 + $0xc] sm:$0xf]
    %v456 = vld [vmem:[#allocation11 + $0x10] sm:$0xf]
    %v457 = vld [vmem:[#allocation11 + $0x14] sm:$0xf]
    %v458 = vld [vmem:[#allocation11 + $0x18] sm:$0xf]
    %v459 = vld [vmem:[#allocation11 + $0x1c] sm:$0xf]
    %v460 = vld [vmem:[#allocation11 + $0x20] sm:$0xf]
    %v461 = vld [vmem:[#allocation11 + $0x24] sm:$0xf]
    %v462 = vld [vmem:[#allocation11 + $0x28] sm:$0xf]
    %v463 = vld [vmem:[#allocation11 + $0x2c] sm:$0xf]
    %v464 = vld [vmem:[#allocation11 + $0x30] sm:$0xf]
    %v465 = vld [vmem:[#allocation11 + $0x34] sm:$0xf]
    %v466 = vld [vmem:[#allocation11 + $0x38] sm:$0xf]
    %v467 = vld [vmem:[#allocation11 + $0x3c] sm:$0xf]
    %v468 = vld [vmem:[%s8] sm:$0x1]
    %v469 = vpack.c.bf16 %v451, %v451
    %v471 = vlaneseq
    %v472 = vshrl.u32 %v471, 7
    %v473 = vsub.s32 0, %v472
    %v474 = vrot.slane %v468, %v473
    %v492 = vunpack.c.l.b16 %v452
    %v493 = vunpack.c.l.b16 %v453
    %v494 = vunpack.c.l.b16 %v454
    %v495 = vunpack.c.l.b16 %v455
    %v496 = vunpack.c.l.b16 %v456
    %v497 = vunpack.c.l.b16 %v457
    %v498 = vunpack.c.l.b16 %v458
    %v499 = vunpack.c.l.b16 %v459
    %v500 = vunpack.c.l.b16 %v460
    %v501 = vunpack.c.l.b16 %v461
    %v502 = vunpack.c.l.b16 %v462
    %v503 = vunpack.c.l.b16 %v463
    %v504 = vunpack.c.l.b16 %v464
    %v505 = vunpack.c.l.b16 %v465
    %v506 = vunpack.c.l.b16 %v466
    %v507 = vunpack.c.l.b16 %v467
    %v508 = vpack.c.b16 %v493, %v492
    %v509 = vpack.c.b16 %v495, %v494
    %v510 = vpack.c.b16 %v497, %v496
    %v511 = vpack.c.b16 %v499, %v498
    %v512 = vpack.c.b16 %v501, %v500
    %v513 = vpack.c.b16 %v503, %v502
    %v514 = vpack.c.b16 %v505, %v504
    %v515 = vpack.c.b16 %v507, %v506
    %524 = vmatprep.subr.bf16.mxu0 0
    %525 = vmatpush1.bf16.msra.mxu0 %v515
    %526 = vmatprep.subr.bf16.mxu0 0
    %527 = vmatpush1.bf16.msra.mxu0 %v514
    %528 = vmatprep.subr.bf16.mxu0 0
    %529 = vmatpush1.bf16.msra.mxu0 %v513
    %530 = vmatprep.subr.bf16.mxu0 0
    %531 = vmatpush1.bf16.msra.mxu0 %v512
    %532 = vmatprep.subr.bf16.mxu0 0
    %533 = vmatpush1.bf16.msra.mxu0 %v511
    %534 = vmatprep.subr.bf16.mxu0 0
    %535 = vmatpush1.bf16.msra.mxu0 %v510
    %536 = vmatprep.subr.bf16.mxu0 0
    %537 = vmatpush1.bf16.msra.mxu0 %v509
    %538 = vmatprep.subr.bf16.mxu0 0
    %539 = vmatpush1.bf16.msra.mxu0 %v508
    %540 = vmatprep.subr.bf16.mxu0 0
    %541 = vmatpush2.bf16.msra.mxu0 0
    %542 = vmatprep.subr.bf16.mxu0 0
    %543 = vmatpush2.bf16.msra.mxu0 0
    %544 = vmatprep.subr.bf16.mxu0 0
    %545 = vmatpush2.bf16.msra.mxu0 0
    %546 = vmatprep.subr.bf16.mxu0 0
    %547 = vmatpush2.bf16.msra.mxu0 0
    %548 = vmatprep.subr.bf16.mxu0 0
    %549 = vmatpush2.bf16.msra.mxu0 0
    %550 = vmatprep.subr.bf16.mxu0 0
    %551 = vmatpush2.bf16.msra.mxu0 0
    %552 = vmatprep.subr.bf16.mxu0 0
    %553 = vmatpush2.bf16.msra.mxu0 0
    %554 = vmatprep.subr.bf16.mxu0 0
    %555 = vmatpush2.bf16.msra.mxu0 0
    %556 = vmatprep.mubr.bf16.mxu0 0
    %557 = vmatmul.mubr.bf16.gmra.mxu0 %v469
    %v558 = vpop.f32.mrf.mxu0
    %v559 = vadd.f32 %v474, %v558
    %v560 = vpop.f32.mrf.mxu0
    %v561 = vpop.f32.mrf.mxu0
    %v562 = vpop.f32.mrf.mxu0
    %563 = vdwg.mxu0
    %v564 = vxor.u32 %v559, 2147483648
    %v565 = vmul.f32 %v564, 1.442695
    %v566 = vpow.pop %v565
    %v567 = vadd.f32 %v566, 1.0
    %v568 = vrcp.pop %v567
    %v569 = vmul.f32 1.0, %v568
    %570 = vst [vmem:[#allocation13] sm:$0xff] %v569
    // Predicated region
    $region62: #{forward_padded.1} parent=1 // pred_check
      _
    $region63: #{forward_padded.1} parent=1 // pred_check_branch
      %572 = sbr.rel (0) target = $region65
    $region64: #{forward_padded.1} parent=1 // pred_region
      %s574 = ssub.s32 128, 128
      %575 = vsyncadd [#allocation4], %s574
      %s577 = sshll.u32 [#allocation13], 4
      %s578 = int_to_ptr.vmem [resolvable:$true] %s577
      %580 = dma.vmem_to_hbm [thread:$0]  %s578, 128, %s9, [#allocation4]
    $region65: #{forward_padded.1} parent=1 // pred_fallthru
      _
    // Predicated region
    $region66: #{forward_padded.1} parent=1 // pred_check
      _
    $region67: #{forward_padded.1} parent=1 // pred_check_branch
      %582 = sbr.rel (0) target = $region69
    $region68: #{forward_padded.1} parent=1 // pred_region
      %583 = dma.done [#allocation4], 128
    $region69: #{forward_padded.1} parent=1 // pred_fallthru
      _
    %584 = vsyncpa [#allocation3], 1
    %585 = vsyncpa [#allocation6], 1
    %586 = vsyncpa [#allocation9], 1
    %587 = vsyncpa [#allocation12], 1
    %588 = vsyncpa [#allocation4], 1

</llo_original>
